<compile_context>
chip_gen: v5e
topology: v5e:2x2
jax: 0.10.0
libtpu: 0.0.40
codegen_flags: <defaults>
</compile_context>

<pallas_src>
import jax
import jax.numpy as jnp
from jax.experimental import pallas as pl
from jax.experimental.pallas import tpu as pltpu

H1, H2 = 64, 16


def mlp_kernel(x_ref, w1_ref, b1_ref, w2_ref, b2_ref, w3_ref, b3_ref, o_ref):
    # Layer 1 on the MXU: (TB, L) @ (L, 64), bf16 inputs, f32 accumulation.
    h1 = jnp.dot(x_ref[...], w1_ref[...], preferred_element_type=jnp.float32)
    h1 = jnp.maximum(h1 + b1_ref[...], 0.0)
    # (Dropout: identity in eval mode.)

    # Layer 2 on the MXU: (TB, 64) @ (64, 16), f32.
    h2 = jnp.dot(h1, w2_ref[...], preferred_element_type=jnp.float32)
    h2 = jnp.maximum(h2 + b2_ref[...], 0.0)

    # Layer 3 (out_features = 1): keep it off the MXU — VPU multiply + lane
    # reduce instead of a K=16, N=1 matmul padded to a full MXU tile.
    out = jnp.sum(h2 * w3_ref[...], axis=-1, keepdims=True) + b3_ref[...]
    o_ref[...] = out.astype(o_ref.dtype)


def mlp_forward(x, params, *, input_dtype=jnp.bfloat16, max_tile_b=1024):
    """x: (B, ...) — flattened to (B, length) like x.view(x.size(0), -1)."""
    b = x.shape[0]
    x2d = x.reshape(b, -1)
    l = x2d.shape[1]

    w1, b1, w2, b2, w3, b3 = params
    # x and W1 dominate HBM traffic -> read them in bf16 (f32 accumulation).
    x2d = x2d.astype(input_dtype)
    w1 = w1.astype(input_dtype)
    b1 = b1.astype(jnp.float32)
    w2 = w2.astype(jnp.float32)
    b2 = b2.astype(jnp.float32)
    w3_row = w3.reshape(1, H2).astype(jnp.float32)  # (16, 1) -> (1, 16)
    b3 = b3.reshape(1, 1).astype(jnp.float32)

    # Batch tile: multiple of 8 sublanes, x tile bounded to ~8 MiB per buffer
    # (double-buffered => ~16 MiB, safe on v7x's 64 MiB VMEM; roomy on v5e/v6e).
    itemsize = jnp.dtype(input_dtype).itemsize
    tile_b = min(max_tile_b, max(8, (8 * 1024 * 1024) // max(1, l * itemsize)))
    tile_b = max(8, (tile_b // 8) * 8)
    b8 = ((b + 7) // 8) * 8
    tile_b = min(tile_b, b8)
    b_pad = pl.cdiv(b, tile_b) * tile_b
    if b_pad != b:
        x2d = jnp.pad(x2d, ((0, b_pad - b), (0, 0)))
    n_tiles = b_pad // tile_b

    def resident(shape):
        return pl.BlockSpec(shape, lambda i: (0,) * len(shape))

    flops = 2 * b_pad * (l * H1 + H1 * H2 + H2)
    bytes_accessed = int(
        b_pad * l * itemsize            # x read
        + b_pad * 4                     # output write
        + w1.size * itemsize
        + (b1.size + w2.size + b2.size + w3_row.size + b3.size) * 4
    )

    out = pl.pallas_call(
        mlp_kernel,
        out_shape=jax.ShapeDtypeStruct((b_pad, 1), jnp.float32),
        grid=(n_tiles,),
        in_specs=[
            pl.BlockSpec((tile_b, l), lambda i: (i, 0)),
            resident(w1.shape), resident(b1.shape),
            resident(w2.shape), resident(b2.shape),
            resident(w3_row.shape), resident(b3.shape),
        ],
        out_specs=pl.BlockSpec((tile_b, 1), lambda i: (i, 0)),
        compiler_params=pltpu.CompilerParams(
            dimension_semantics=("parallel",)),
        cost_estimate=pl.CostEstimate(
            flops=flops, transcendentals=0, bytes_accessed=bytes_accessed),
    )(x2d, w1, b1, w2, b2, w3_row, b3)
    return out[:b]


def init_params(key, length):
    """Deterministic init matching PyTorch nn.Linear: U(-1/sqrt(in), 1/sqrt(in)).
    Weights stored as (in, out) = PyTorch weight.T."""
    def linear(k, fan_in, fan_out):
        kw, kb = jax.random.split(k)
        bound = 1.0 / jnp.sqrt(float(fan_in))
        w = jax.random.uniform(kw, (fan_in, fan_out), jnp.float32, -bound, bound)
        b = jax.random.uniform(kb, (1, fan_out), jnp.float32, -bound, bound)
        return w, b

    k1, k2, k3 = jax.random.split(key, 3)
    w1, b1 = linear(k1, length, H1)
    w2, b2 = linear(k2, H1, H2)
    w3, b3 = linear(k3, H2, 1)
    return (w1, b1, w2, b2, w3, b3)


if __name__ == "__main__":
    key = jax.random.PRNGKey(0)
    kx, kp = jax.random.split(key)

    batch, length = 8, 32
    x = jax.random.normal(kx, (batch, length), dtype=jnp.float32)
    params = init_params(kp, length)

    out = jax.block_until_ready(mlp_forward(x, params))

    # Pure-JAX reference (same math: bf16 layer-1 inputs, f32 accumulation).
    w1, b1, w2, b2, w3, b3 = params
    ref = jnp.dot(x.astype(jnp.bfloat16), w1.astype(jnp.bfloat16),
                  preferred_element_type=jnp.float32) + b1
    ref = jnp.maximum(ref, 0.0)
    ref = jnp.maximum(ref @ w2 + b2, 0.0)
    ref = ref @ w3 + b3.reshape(1, 1)

    assert out.shape == (batch, 1)
    assert jnp.allclose(out, ref, atol=5e-3, rtol=5e-3), float(
        jnp.max(jnp.abs(out - ref)))

    print("KERNEL_OK")
</pallas_src>

<mosaic_0001>
module attributes {stable_mosaic.version = 11 : i64} {
  func.func @mlp_kernel(%arg0: i32, %arg1: memref<8x32xbf16, #tpu.memory_space<vmem>>, %arg2: memref<32x64xbf16, #tpu.memory_space<vmem>>, %arg3: memref<1x64xf32, #tpu.memory_space<vmem>>, %arg4: memref<64x16xf32, #tpu.memory_space<vmem>>, %arg5: memref<1x16xf32, #tpu.memory_space<vmem>>, %arg6: memref<1x16xf32, #tpu.memory_space<vmem>>, %arg7: memref<1x1xf32, #tpu.memory_space<vmem>>, %arg8: memref<8x1xf32, #tpu.memory_space<vmem>>) attributes {dimension_semantics = [#tpu.dimension_semantics<parallel>], iteration_bounds = array<i64: 1>, scalar_prefetch = 0 : i64, scratch_operands = 0 : i64, tpu.core_type = #tpu.core_type<tc>, window_params = [{transform_indices = @transform_0, window_bounds = array<i64: 8, 32>}, {pipeline_mode = #tpu.pipeline_mode<synchronous>, transform_indices = @transform_1, window_bounds = array<i64: 32, 64>}, {pipeline_mode = #tpu.pipeline_mode<synchronous>, transform_indices = @transform_2, window_bounds = array<i64: 1, 64>}, {pipeline_mode = #tpu.pipeline_mode<synchronous>, transform_indices = @transform_3, window_bounds = array<i64: 64, 16>}, {pipeline_mode = #tpu.pipeline_mode<synchronous>, transform_indices = @transform_4, window_bounds = array<i64: 1, 16>}, {pipeline_mode = #tpu.pipeline_mode<synchronous>, transform_indices = @transform_5, window_bounds = array<i64: 1, 16>}, {pipeline_mode = #tpu.pipeline_mode<synchronous>, transform_indices = @transform_6, window_bounds = array<i64: 1, 1>}, {transform_indices = @transform_7, window_bounds = array<i64: 8, 1>}]} {
    %c0 = arith.constant 0 : index
    %c0_0 = arith.constant 0 : index
    %0 = vector.load %arg1[%c0, %c0_0] : memref<8x32xbf16, #tpu.memory_space<vmem>>, vector<8x32xbf16>
    %c0_1 = arith.constant 0 : index
    %c0_2 = arith.constant 0 : index
    %1 = vector.load %arg2[%c0_1, %c0_2] : memref<32x64xbf16, #tpu.memory_space<vmem>>, vector<32x64xbf16>
    %cst = arith.constant dense<0.000000e+00> : vector<8x64xf32>
    %2 = tpu.matmul %0, %1, %cst {dimension_numbers = #tpu.dot_dimension_numbers<[1], [0], [0], [1], [0, 0, 1, 1], [], []>} : vector<8x32xbf16>, vector<32x64xbf16>, vector<8x64xf32> -> vector<8x64xf32>
    %c0_3 = arith.constant 0 : index
    %c0_4 = arith.constant 0 : index
    %3 = vector.load %arg3[%c0_3, %c0_4] : memref<1x64xf32, #tpu.memory_space<vmem>>, vector<1x64xf32>
    %4 = vector.broadcast %3 : vector<1x64xf32> to vector<8x64xf32>
    %5 = arith.addf %2, %4 : vector<8x64xf32>
    %cst_5 = arith.constant 0.000000e+00 : f32
    %6 = vector.broadcast %cst_5 : f32 to vector<8x64xf32>
    %7 = arith.maximumf %5, %6 : vector<8x64xf32>
    %c0_6 = arith.constant 0 : index
    %c0_7 = arith.constant 0 : index
    %8 = vector.load %arg4[%c0_6, %c0_7] : memref<64x16xf32, #tpu.memory_space<vmem>>, vector<64x16xf32>
    %cst_8 = arith.constant dense<0.000000e+00> : vector<8x16xf32>
    %9 = tpu.matmul %7, %8, %cst_8 {dimension_numbers = #tpu.dot_dimension_numbers<[1], [0], [0], [1], [0, 0, 1, 1], [], []>} : vector<8x64xf32>, vector<64x16xf32>, vector<8x16xf32> -> vector<8x16xf32>
    %c0_9 = arith.constant 0 : index
    %c0_10 = arith.constant 0 : index
    %10 = vector.load %arg5[%c0_9, %c0_10] : memref<1x16xf32, #tpu.memory_space<vmem>>, vector<1x16xf32>
    %11 = vector.broadcast %10 : vector<1x16xf32> to vector<8x16xf32>
    %12 = arith.addf %9, %11 : vector<8x16xf32>
    %cst_11 = arith.constant 0.000000e+00 : f32
    %13 = vector.broadcast %cst_11 : f32 to vector<8x16xf32>
    %14 = arith.maximumf %12, %13 : vector<8x16xf32>
    %c0_12 = arith.constant 0 : index
    %c0_13 = arith.constant 0 : index
    %15 = vector.load %arg6[%c0_12, %c0_13] : memref<1x16xf32, #tpu.memory_space<vmem>>, vector<1x16xf32>
    %16 = vector.broadcast %15 : vector<1x16xf32> to vector<8x16xf32>
    %17 = arith.mulf %14, %16 : vector<8x16xf32>
    %cst_14 = arith.constant dense<0.000000e+00> : vector<8xf32>
    %18 = vector.multi_reduction <add>, %17, %cst_14 [1] : vector<8x16xf32> to vector<8xf32>
    %19 = vector.shape_cast %18 : vector<8xf32> to vector<8x1xf32>
    %c0_15 = arith.constant 0 : index
    %c0_16 = arith.constant 0 : index
    %20 = vector.load %arg7[%c0_15, %c0_16] : memref<1x1xf32, #tpu.memory_space<vmem>>, vector<1x1xf32>
    %21 = vector.broadcast %20 : vector<1x1xf32> to vector<8x1xf32>
    %22 = arith.addf %19, %21 : vector<8x1xf32>
    %c0_17 = arith.constant 0 : index
    %c0_18 = arith.constant 0 : index
    %23 = vector.load %arg8[%c0_17, %c0_18] : memref<8x1xf32, #tpu.memory_space<vmem>>, vector<8x1xf32>
    tpu.vector_store %arg8[%c0_17, %c0_18], %22 {strides = array<i32>} : memref<8x1xf32, #tpu.memory_space<vmem>>, vector<8x1xf32>,
    return
  }
  func.func @transform_0(%arg0: i32) -> (i32, i32) {
    %c0_i32 = arith.constant 0 : i32
    %c0_i32_0 = arith.constant 0 : i32
    return %arg0, %c0_i32 : i32, i32
  }
  func.func @transform_1(%arg0: i32) -> (i32, i32) {
    %c0_i32 = arith.constant 0 : i32
    %c0_i32_0 = arith.constant 0 : i32
    %c0_i32_1 = arith.constant 0 : i32
    return %c0_i32, %c0_i32_0 : i32, i32
  }
  func.func @transform_2(%arg0: i32) -> (i32, i32) {
    %c0_i32 = arith.constant 0 : i32
    %c0_i32_0 = arith.constant 0 : i32
    %c0_i32_1 = arith.constant 0 : i32
    return %c0_i32, %c0_i32_0 : i32, i32
  }
  func.func @transform_3(%arg0: i32) -> (i32, i32) {
    %c0_i32 = arith.constant 0 : i32
    %c0_i32_0 = arith.constant 0 : i32
    %c0_i32_1 = arith.constant 0 : i32
    return %c0_i32, %c0_i32_0 : i32, i32
  }
  func.func @transform_4(%arg0: i32) -> (i32, i32) {
    %c0_i32 = arith.constant 0 : i32
    %c0_i32_0 = arith.constant 0 : i32
    %c0_i32_1 = arith.constant 0 : i32
    return %c0_i32, %c0_i32_0 : i32, i32
  }
  func.func @transform_5(%arg0: i32) -> (i32, i32) {
    %c0_i32 = arith.constant 0 : i32
    %c0_i32_0 = arith.constant 0 : i32
    %c0_i32_1 = arith.constant 0 : i32
    return %c0_i32, %c0_i32_0 : i32, i32
  }
  func.func @transform_6(%arg0: i32) -> (i32, i32) {
    %c0_i32 = arith.constant 0 : i32
    %c0_i32_0 = arith.constant 0 : i32
    %c0_i32_1 = arith.constant 0 : i32
    return %c0_i32, %c0_i32_0 : i32, i32
  }
  func.func @transform_7(%arg0: i32) -> (i32, i32) {
    %c0_i32 = arith.constant 0 : i32
    %c0_i32_0 = arith.constant 0 : i32
    return %arg0, %c0_i32 : i32, i32
  }
}

</mosaic_0001>

<llo_original>
// kernel: tpu_custom_call.1
$region0: #{tpu_custom_call.1}
  #allocation0 [shape = 'u32[]', space=smem, size = 0x4, offset = 0x4, fixed_abs, tag = 'smem constant byte address 0x4 - core index']
  #allocation1 [shape = 'u32[72,128]{1,0:T(1,128)}', space=vmem, size = 0x9000, scoped, tag = 'internal scratch']
  #allocation2 [shape = 'f32[1,1]{1,0:T(1,128)S(1)}', space=vmem, size = 0x200, scoped, tag = 'scoped memory for tpu_custom_call.1']
  %s0 = inlined_call_operand.vmem [shape: bf16[8,32], index: 0, kind: input, shape index: {}]
  %s1 = inlined_call_operand.vmem [shape: bf16[32,64], index: 1, kind: input, shape index: {}]
  %s2 = inlined_call_operand.vmem [shape: f32[1,64], index: 2, kind: input, shape index: {}]
  %s3 = inlined_call_operand.vmem [shape: f32[64,16], index: 3, kind: input, shape index: {}]
  %s4 = inlined_call_operand.vmem [shape: f32[1,16], index: 4, kind: input, shape index: {}]
  %s5 = inlined_call_operand.vmem [shape: f32[1,16], index: 5, kind: input, shape index: {}]
  %s6 = inlined_call_operand.<no memory space> [shape: f32[1,1], index: 6, kind: input, shape index: {}]
  %s7 = inlined_call_operand.vmem [shape: f32[8,1], index: 7, kind: output, shape index: {}]
  %s8 = sld [smem:[#allocation0]]
  $region38: #{tpu_custom_call.1} parent=0
    _
  %s10 = ssub.s32 1, %s8
  %s11 = scalar_select 0, %s10, %s8
  %v12 = vstv %s6
  %13 = vst [vmem:[#allocation2] sm:$0x1] %v12
  // Predicated region
  $region2: #{tpu_custom_call.1} parent=0 // pred_check
    _
  $region3: #{tpu_custom_call.1} parent=0 // pred_check_branch
    %15 = sbr.rel (0) target = $region5
  $region4: #{tpu_custom_call.1} parent=0 // pred_region
    _
  $region5: #{tpu_custom_call.1} parent=0 // pred_fallthru
    _
  // Predicated region
  $region6: #{tpu_custom_call.1} parent=0 // pred_check
    _
  $region7: #{tpu_custom_call.1} parent=0 // pred_check_branch
    %17 = sbr.rel (0) target = $region9
  $region8: #{tpu_custom_call.1} parent=0 // pred_region
    _
  $region9: #{tpu_custom_call.1} parent=0 // pred_fallthru
    _
  // Predicated region
  $region10: #{tpu_custom_call.1} parent=0 // pred_check
    _
  $region11: #{tpu_custom_call.1} parent=0 // pred_check_branch
    %19 = sbr.rel (0) target = $region13
  $region12: #{tpu_custom_call.1} parent=0 // pred_region
    _
  $region13: #{tpu_custom_call.1} parent=0 // pred_fallthru
    _
  // Predicated region
  $region14: #{tpu_custom_call.1} parent=0 // pred_check
    _
  $region15: #{tpu_custom_call.1} parent=0 // pred_check_branch
    %21 = sbr.rel (0) target = $region17
  $region16: #{tpu_custom_call.1} parent=0 // pred_region
    _
  $region17: #{tpu_custom_call.1} parent=0 // pred_fallthru
    _
  // Predicated region
  $region18: #{tpu_custom_call.1} parent=0 // pred_check
    _
  $region19: #{tpu_custom_call.1} parent=0 // pred_check_branch
    %23 = sbr.rel (0) target = $region21
  $region20: #{tpu_custom_call.1} parent=0 // pred_region
    _
  $region21: #{tpu_custom_call.1} parent=0 // pred_fallthru
    _
  // Predicated region
  $region22: #{tpu_custom_call.1} parent=0 // pred_check
    _
  $region23: #{tpu_custom_call.1} parent=0 // pred_check_branch
    %25 = sbr.rel (0) target = $region25
  $region24: #{tpu_custom_call.1} parent=0 // pred_region
    _
  $region25: #{tpu_custom_call.1} parent=0 // pred_fallthru
    _
  // Predicated region
  $region26: #{tpu_custom_call.1} parent=0 // pred_check
    _
  $region27: #{tpu_custom_call.1} parent=0 // pred_check_branch
    %27 = sbr.rel (0) target = $region29
  $region28: #{tpu_custom_call.1} parent=0 // pred_region
    _
  $region29: #{tpu_custom_call.1} parent=0 // pred_fallthru
    _
  %v29 = vld [vmem:[%s0] sm:$0xf]
  %v30 = vld [vmem:[%s1] sm:$0xf]
  %v31 = vld [vmem:[%s1 + $0x4] sm:$0xf]
  %v32 = vld [vmem:[%s1 + $0x8] sm:$0xf]
  %v33 = vld [vmem:[%s1 + $0xc] sm:$0xf]
  %v34 = vld [vmem:[%s2] sm:$0x1]
  %v36 = vperm.slane %v34, 0
  %v42 = vunpack.c.l.b16 %v30
  %v43 = vunpack.c.l.b16 %v31
  %v44 = vunpack.c.l.b16 %v32
  %v45 = vunpack.c.l.b16 %v33
  %v46 = vpack.c.b16 %v43, %v42
  %v47 = vpack.c.b16 %v45, %v44
  %vm50 = vcmask 261120
  %v52 = vsel %vm50, %v29, 0
  %54 = vmatpush.bf16.msra.mxu0 0
  %55 = vmatpush.bf16.msra.mxu0 0
  %56 = vmatpush.bf16.msra.mxu0 0
  %57 = vmatpush.bf16.msra.mxu0 0
  %58 = vmatpush.bf16.msra.mxu0 0
  %59 = vmatpush.bf16.msra.mxu0 0
  %60 = vmatpush.bf16.msra.mxu0 %v47
  %61 = vmatpush.bf16.msra.mxu0 %v46
  %62 = vmatmul.bf16.gmra.mxu0 %v52
  %v63 = vpop.f32.mrf.mxu0
  %v64 = vadd.f32 %v36, %v63
  %v65 = vpop.f32.mrf.mxu0
  %66 = vdwg.mxu0
  %v67 = vmax.f32 %v64, 0.0
  %v68 = vld [vmem:[%s3] sm:$0xff]
  %v69 = vld [vmem:[%s3 + $0x8] sm:$0xff]
  %v70 = vld [vmem:[%s3 + $0x10] sm:$0xff]
  %v71 = vld [vmem:[%s3 + $0x18] sm:$0xff]
  %v72 = vld [vmem:[%s3 + $0x20] sm:$0xff]
  %v73 = vld [vmem:[%s3 + $0x28] sm:$0xff]
  %v74 = vld [vmem:[%s3 + $0x30] sm:$0xff]
  %v75 = vld [vmem:[%s3 + $0x38] sm:$0xff]
  %v76 = vld [vmem:[%s4] sm:$0x1]
  %v78 = vperm.slane %v76, 0
  %vm80 = vcmask 523264
  %v82 = vsel %vm80, %v67, 0
  %84 = vmatpush.msra.mxu0 0.0
  %85 = vmatpush.msra.mxu0 0.0
  %86 = vmatpush.msra.mxu0 0.0
  %87 = vmatpush.msra.mxu0 0.0
  %88 = vmatpush.msra.mxu0 0.0
  %89 = vmatpush.msra.mxu0 0.0
  %90 = vmatpush.msra.mxu0 0.0
  %91 = vmatpush.msra.mxu0 0.0
  %92 = vmatpush.msra.mxu0 %v75
  %93 = vmatpush.msra.mxu0 %v74
  %94 = vmatpush.msra.mxu0 %v73
  %95 = vmatpush.msra.mxu0 %v72
  %96 = vmatpush.msra.mxu0 %v71
  %97 = vmatpush.msra.mxu0 %v70
  %98 = vmatpush.msra.mxu0 %v69
  %99 = vmatpush.msra.mxu0 %v68
  %100 = vmatmul.f32.gmra.mxu0 %v82
  %v101 = vpop.f32.mrf.mxu0
  %v102 = vadd.f32 %v78, %v101
  %103 = vdwg.mxu0
  %v104 = vmax.f32 %v102, 0.0
  %v105 = vld [vmem:[%s5] sm:$0x1]
  %v107 = vperm.slane %v105, 0
  %v109 = vmul.f32 %v104, %v107
  %vm110 = vcmask 130048
  %v111 = vsel %vm110, %v109, 0.0
  %112 = vadd.xlane.f32.xlu0 %v111
  %v113 = vpop.xlane.xlu0 %112
  %v114 = vld [vmem:[#allocation2] sm:$0x1]
  %v116 = vperm.slane %v114, 0
  %v118 = vadd.f32 %v113, %v116
  %vm119 = vcmask 7168
  %120 = vst.msk [vmem:[%s7] sm:$0xff] %vm119, %v118
  // Predicated region
  $region30: #{tpu_custom_call.1} parent=0 // pred_check
    _
  $region31: #{tpu_custom_call.1} parent=0 // pred_check_branch
    %122 = sbr.rel (0) target = $region33
  $region32: #{tpu_custom_call.1} parent=0 // pred_region
    _
  $region33: #{tpu_custom_call.1} parent=0 // pred_fallthru
    _
  // Predicated region
  $region34: #{tpu_custom_call.1} parent=0 // pred_check
    _
  $region35: #{tpu_custom_call.1} parent=0 // pred_check_branch
    %124 = sbr.rel (0) target = $region37
  $region36: #{tpu_custom_call.1} parent=0 // pred_region
    _
  $region37: #{tpu_custom_call.1} parent=0 // pred_fallthru
    _

</llo_original>
